<compile_context>
chip_gen: v6e
topology: v6e:2x2x1
jax: 0.10.0
libtpu: 0.0.40
codegen_flags: <defaults>
</compile_context>

<pallas_src>
import jax
import jax.numpy as jnp
from jax.experimental import pallas as pl
from jax.experimental.pallas import tpu as pltpu


def attn_forward(hidden, encoder_outputs, weight, bias=None, *,
                 tile_l=None, block_b=None):
    """Forward pass of the PyTorch `Attn` module.

    hidden:          (1, B, H)
    encoder_outputs: (L, B, H)  native seq-major layout (NOT transposed here)
    weight:          (H, H)     PyTorch Linear weight (out, in), un-transposed
    bias:            (H,)       accepted for API parity; folded out (it adds a
                                per-row constant that cancels exactly under softmax)
    returns:         (B, 1, L)  float32 attention weights
    """
    del bias  # cancels exactly under the softmax (review item)

    L, B, H = encoder_outputs.shape
    hid = hidden[0]                                   # (B, H), tiny squeeze

    # ---- batch tiling: the "parallel" grid axis (v7x can split it over 2 TCs) ----
    if block_b is None:
        block_b = 8 if (B % 8 == 0 and B > 8) else B
    assert B % block_b == 0, (B, block_b)
    nb = B // block_b

    # ---- L tiling sized against a generation-safe VMEM budget --------------------
    # enc tile is double-buffered by the pipeline: 2 * (tile_l * block_b * H * isz)
    # <= ~24 MiB, comfortably inside v7x's 64 MiB physical VMEM (the smallest).
    itemsize = jnp.dtype(encoder_outputs.dtype).itemsize
    if tile_l is None:
        per_buffer_budget = 12 * 1024 * 1024
        rows = max(1, per_buffer_budget // (block_b * H * itemsize))
        tile_l = min(L, rows)
        if tile_l >= 8:
            tile_l -= tile_l % 8                      # sublane-friendly
    nl = pl.cdiv(L, tile_l)
    Lp = nl * tile_l                                  # padded L covered by the grid

    def kernel(hid_ref, enc_ref, w_ref, out_ref, v_ref, s_ref):
        l = pl.program_id(1)

        # Fold the Linear into the hidden vector ONCE per batch tile (hoisted out of
        # the per-L-tile body).  The Linear's W.T cancels against the score
        # contraction, so no transpose of W is needed:  v[b, :] = hid[b, :] @ W.
        @pl.when(l == 0)
        def _init():
            v_ref[...] = jnp.dot(hid_ref[...], w_ref[...],
                                 preferred_element_type=jnp.float32)     # (bb, H)

        # Per L-tile partial scores in the tensor's native (tile_l, bb) orientation:
        #   part[l, b] = sum_h enc[l, b, h] * v[b, h]
        # VPU multiply + lane (H) reduce; f32 accumulation regardless of input dtype.
        part = jnp.sum(enc_ref[...] * v_ref[...][None, :, :], axis=2)    # (tile_l, bb)
        off = pl.multiple_of(l * tile_l, tile_l)
        s_ref[pl.ds(off, tile_l), :] = part

        # Finalize once per batch tile: tiny (Lp, bb) -> (bb, Lp) reorientation of the
        # *scores* only, masked softmax over L, lane-dense (bb, L) output store.
        @pl.when(l == pl.num_programs(1) - 1)
        def _finalize():
            s_bl = s_ref[...].T                                          # (bb, Lp)
            if Lp > L:  # static: only emitted when the last L tile is ragged
                col = jax.lax.broadcasted_iota(jnp.int32, (block_b, Lp), 1)
                s_bl = jnp.where(col < L, s_bl, -jnp.inf)
            m = jnp.max(s_bl, axis=1, keepdims=True)
            e = jnp.exp(s_bl - m)
            den = jnp.sum(e, axis=1, keepdims=True)
            # Exact normalization; pl.reciprocal(den, approx=True) is the EUP-slot
            # option when ~2^-12 relative error on row sums is acceptable downstream.
            p = e / den
            out_ref[...] = p[:, :L].astype(out_ref.dtype)

    grid_spec = pltpu.PrefetchScalarGridSpec(
        num_scalar_prefetch=0,
        grid=(nb, nl),                                 # reduction-ish L axis last
        in_specs=[
            pl.BlockSpec((block_b, H), lambda b, l: (b, 0)),             # hid
            pl.BlockSpec((tile_l, block_b, H), lambda b, l: (l, b, 0)),  # enc, native layout
            pl.BlockSpec((H, H), lambda b, l: (0, 0)),                   # W (resident)
        ],
        out_specs=pl.BlockSpec((block_b, L), lambda b, l: (b, 0)),       # resident over l
        scratch_shapes=[
            pltpu.VMEM((block_b, H), jnp.float32),                       # v = hid @ W
            pltpu.VMEM((Lp, block_b), jnp.float32),                      # raw scores
        ],
    )

    out = pl.pallas_call(
        kernel,
        out_shape=jax.ShapeDtypeStruct((B, L), jnp.float32),
        grid_spec=grid_spec,
        compiler_params=pltpu.CompilerParams(
            dimension_semantics=("parallel", "arbitrary"),
            vmem_limit_bytes=48 * 1024 * 1024,        # headroom, still < v7x's 64 MiB
        ),
    )(hid, encoder_outputs, weight)

    return out[:, None, :]                            # (B, 1, L)


def attn_reference(hidden, encoder_outputs, weight, bias):
    # Straight transcription of the PyTorch module (energy formulation), at HIGHEST
    # precision so the f32 contraction is exact on TPU (XLA's DEFAULT f32 matmul
    # precision is bf16-grade and previously dominated the comparison error).
    energy = jnp.einsum("lbh,kh->lbk", encoder_outputs, weight,
                        precision=jax.lax.Precision.HIGHEST) + bias       # Linear
    scores = jnp.sum(hidden * energy, axis=2)                             # (L, B)
    return jax.nn.softmax(scores.T, axis=1)[:, None, :]                   # (B, 1, L)


def _make_inputs(L, B, H, key):
    k1, k2, k3, k4 = jax.random.split(key, 4)

    # Values are rounded to bf16-representable f32 so the check is insensitive to
    # MXU pass-count defaults (products of bf16-exact values are exact under f32
    # accumulation) and so the bf16 run processes identical values.
    def n(k, shape):
        return jax.random.normal(k, shape, jnp.float32).astype(jnp.bfloat16).astype(jnp.float32)

    bound = 1.0 / (H ** 0.5)

    def u(k, shape):
        return jax.random.uniform(k, shape, jnp.float32, -bound, bound
                                  ).astype(jnp.bfloat16).astype(jnp.float32)

    return n(k1, (1, B, H)), n(k2, (L, B, H)), u(k3, (H, H)), u(k4, (H,))


if __name__ == "__main__":
    key = jax.random.PRNGKey(0)

    # (L, B, H, tile_l, input dtype): exercises the multi-tile L pipeline, a ragged
    # last L tile (masked softmax finalize), and the bf16-input bandwidth path.
    cases = [
        (8, 2, 32, 4, jnp.float32),      # 2 even L tiles
        (12, 2, 32, 8, jnp.float32),     # ragged last tile (Lp=16 > L=12)
        (8, 2, 32, None, jnp.bfloat16),  # bf16 inputs, auto tile
    ]
    for L, B, H, tl, dt in cases:
        hidden, enc, weight, bias = _make_inputs(L, B, H, key)
        out = attn_forward(hidden.astype(dt), enc.astype(dt), weight.astype(dt),
                           bias.astype(dt), tile_l=tl)
        out = jax.block_until_ready(out)
        ref = attn_reference(hidden, enc, weight, bias)
        assert out.shape == (B, 1, L), (out.shape, (B, 1, L))
        assert bool(jnp.allclose(out, ref, atol=1e-3, rtol=1e-3)), (
            f"mismatch vs reference: L={L} B={B} H={H} tile_l={tl} dtype={dt}")

    print("KERNEL_OK")
</pallas_src>

<mosaic_0001>
module attributes {stable_mosaic.version = 11 : i64} {
  func.func @kernel(%arg0: i32, %arg1: i32, %arg2: memref<2x32xf32, #tpu.memory_space<vmem>>, %arg3: memref<4x2x32xf32, #tpu.memory_space<vmem>>, %arg4: memref<32x32xf32, #tpu.memory_space<vmem>>, %arg5: memref<2x8xf32, #tpu.memory_space<vmem>>, %arg6: memref<2x32xf32, #tpu.memory_space<vmem>>, %arg7: memref<8x2xf32, #tpu.memory_space<vmem>>) attributes {dimension_semantics = [#tpu.dimension_semantics<parallel>, #tpu.dimension_semantics<arbitrary>], iteration_bounds = array<i64: 1, 2>, scalar_prefetch = 0 : i64, scratch_operands = 2 : i64, tpu.core_type = #tpu.core_type<tc>, window_params = [{transform_indices = @transform_0, window_bounds = array<i64: 2, 32>}, {transform_indices = @transform_1, window_bounds = array<i64: 4, 2, 32>}, {pipeline_mode = #tpu.pipeline_mode<synchronous>, transform_indices = @transform_2, window_bounds = array<i64: 32, 32>}, {transform_indices = @transform_3, window_bounds = array<i64: 2, 8>}]} {
    %c0_i32 = arith.constant 0 : i32
    %0 = arith.cmpi eq, %arg1, %c0_i32 : i32
    %1 = arith.extui %0 : i1 to i32
    %c0_i32_0 = arith.constant 0 : i32
    %2 = arith.cmpi ne, %1, %c0_i32_0 : i32
    scf.if %2 {
      %c0_7 = arith.constant 0 : index
      %c0_8 = arith.constant 0 : index
      %16 = vector.load %arg2[%c0_7, %c0_8] : memref<2x32xf32, #tpu.memory_space<vmem>>, vector<2x32xf32>
      %c0_9 = arith.constant 0 : index
      %c0_10 = arith.constant 0 : index
      %17 = vector.load %arg4[%c0_9, %c0_10] : memref<32x32xf32, #tpu.memory_space<vmem>>, vector<32x32xf32>
      %cst_11 = arith.constant dense<0.000000e+00> : vector<2x32xf32>
      %18 = tpu.matmul %16, %17, %cst_11 {dimension_numbers = #tpu.dot_dimension_numbers<[1], [0], [0], [1], [0, 0, 1, 1], [], []>} : vector<2x32xf32>, vector<32x32xf32>, vector<2x32xf32> -> vector<2x32xf32>
      %c0_12 = arith.constant 0 : index
      %c0_13 = arith.constant 0 : index
      %19 = vector.load %arg6[%c0_12, %c0_13] : memref<2x32xf32, #tpu.memory_space<vmem>>, vector<2x32xf32>
      tpu.vector_store %arg6[%c0_12, %c0_13], %18 {strides = array<i32>} : memref<2x32xf32, #tpu.memory_space<vmem>>, vector<2x32xf32>,
    } else {
    }
    %c0 = arith.constant 0 : index
    %c0_1 = arith.constant 0 : index
    %c0_2 = arith.constant 0 : index
    %3 = vector.load %arg3[%c0, %c0_1, %c0_2] : memref<4x2x32xf32, #tpu.memory_space<vmem>>, vector<4x2x32xf32>
    %c0_3 = arith.constant 0 : index
    %c0_4 = arith.constant 0 : index
    %4 = vector.load %arg6[%c0_3, %c0_4] : memref<2x32xf32, #tpu.memory_space<vmem>>, vector<2x32xf32>
    %5 = vector.shape_cast %4 : vector<2x32xf32> to vector<1x2x32xf32>
    %6 = vector.broadcast %5 : vector<1x2x32xf32> to vector<4x2x32xf32>
    %7 = arith.mulf %3, %6 : vector<4x2x32xf32>
    %cst = arith.constant dense<0.000000e+00> : vector<4x2xf32>
    %8 = vector.multi_reduction <add>, %7, %cst [2] : vector<4x2x32xf32> to vector<4x2xf32>
    %c4_i32 = arith.constant 4 : i32
    %9 = arith.muli %arg1, %c4_i32 : i32
    %10 = tpu.assume_multiple %9, 4 : i32
    %11 = arith.index_cast %10 : i32 to index
    %c0_5 = arith.constant 0 : index
    %12 = vector.load %arg7[%11, %c0_5] : memref<8x2xf32, #tpu.memory_space<vmem>>, vector<4x2xf32>
    tpu.vector_store %arg7[%11, %c0_5], %8 {strides = array<i32>} : memref<8x2xf32, #tpu.memory_space<vmem>>, vector<4x2xf32>,
    %c1_i32 = arith.constant 1 : i32
    %13 = arith.cmpi eq, %arg1, %c1_i32 : i32
    %14 = arith.extui %13 : i1 to i32
    %c0_i32_6 = arith.constant 0 : i32
    %15 = arith.cmpi ne, %14, %c0_i32_6 : i32
    scf.if %15 {
      %c0_7 = arith.constant 0 : index
      %c0_8 = arith.constant 0 : index
      %16 = vector.load %arg7[%c0_7, %c0_8] : memref<8x2xf32, #tpu.memory_space<vmem>>, vector<8x2xf32>
      %17 = tpu.transpose %16, [1, 0] : vector<8x2xf32> -> vector<2x8xf32>
      %cst_9 = arith.constant dense<0xFF800000> : vector<2xf32>
      %18 = vector.multi_reduction <maximumf>, %17, %cst_9 [1] : vector<2x8xf32> to vector<2xf32>
      %19 = vector.shape_cast %18 : vector<2xf32> to vector<2x1xf32>
      %20 = vector.broadcast %19 : vector<2x1xf32> to vector<2x8xf32>
      %21 = arith.subf %17, %20 : vector<2x8xf32>
      %22 = math.exp %21 : vector<2x8xf32>
      %cst_10 = arith.constant dense<0.000000e+00> : vector<2xf32>
      %23 = vector.multi_reduction <add>, %22, %cst_10 [1] : vector<2x8xf32> to vector<2xf32>
      %24 = vector.shape_cast %23 : vector<2xf32> to vector<2x1xf32>
      %25 = vector.broadcast %24 : vector<2x1xf32> to vector<2x8xf32>
      %26 = arith.divf %22, %25 : vector<2x8xf32>
      %c0_11 = arith.constant 0 : index
      %c0_12 = arith.constant 0 : index
      %27 = vector.load %arg5[%c0_11, %c0_12] : memref<2x8xf32, #tpu.memory_space<vmem>>, vector<2x8xf32>
      tpu.vector_store %arg5[%c0_11, %c0_12], %26 {strides = array<i32>} : memref<2x8xf32, #tpu.memory_space<vmem>>, vector<2x8xf32>,
    } else {
    }
    return
  }
  func.func @transform_0(%arg0: i32, %arg1: i32) -> (i32, i32) {
    %c0_i32 = arith.constant 0 : i32
    %c0_i32_0 = arith.constant 0 : i32
    return %arg0, %c0_i32 : i32, i32
  }
  func.func @transform_1(%arg0: i32, %arg1: i32) -> (i32, i32, i32) {
    %c0_i32 = arith.constant 0 : i32
    %c0_i32_0 = arith.constant 0 : i32
    return %arg1, %arg0, %c0_i32 : i32, i32, i32
  }
  func.func @transform_2(%arg0: i32, %arg1: i32) -> (i32, i32) {
    %c0_i32 = arith.constant 0 : i32
    %c0_i32_0 = arith.constant 0 : i32
    %c0_i32_1 = arith.constant 0 : i32
    return %c0_i32, %c0_i32_0 : i32, i32
  }
  func.func @transform_3(%arg0: i32, %arg1: i32) -> (i32, i32) {
    %c0_i32 = arith.constant 0 : i32
    %c0_i32_0 = arith.constant 0 : i32
    return %arg0, %c0_i32 : i32, i32
  }
}

</mosaic_0001>

<llo_original>
// kernel: tpu_custom_call.1
$region0: #{tpu_custom_call.1}
  #allocation0 [shape = 'u32[]', space=smem, size = 0x4, offset = 0x4, fixed_abs, tag = 'smem constant byte address 0x4 - core index']
  #allocation1 [shape = 'u32[144,128]{1,0:T(1,128)}', space=vmem, size = 0x12000, scoped, tag = 'internal scratch']
  #allocation2 [shape = 'f32[2,32]{1,0:T(2,128)}', space=vmem, size = 0x400, scoped, tag = 'scratch operand']
  #allocation3 [shape = 'f32[8,2]{1,0:T(8,128)}', space=vmem, size = 0x1000, scoped, tag = 'scratch operand']
  %s0 = inlined_call_operand.hbm [shape: f32[2,32], index: 0, kind: input, shape index: {}]
  %s1 = inlined_call_operand.hbm [shape: f32[8,2,32], index: 1, kind: input, shape index: {}]
  %s2 = inlined_call_operand.hbm [shape: f32[32,32], index: 2, kind: input, shape index: {}]
  %s3 = inlined_call_operand.hbm [shape: f32[2,8], index: 3, kind: output, shape index: {}]
  %s4 = sld [smem:[#allocation0]]
  $region65: #{tpu_custom_call.1} parent=0
    _
  %s6 = ssub.s32 1, %s4
  %s7 = scalar_select 0, %s6, %s4
  $region1: #{tpu_custom_call.1} parent=0
    #allocation4 [shape = 'u8[1024]{0}', space=vmem, size = 0x400, scoped, tag = 'input window, operand 0, single buffered']
    #allocation5 [shape = 's32[2]{0}', space=sflag, size = 0x8, scoped, tag = 'scoped memory for tpu_custom_call.1']
    #allocation6 [shape = 's32[2]{0}', space=sflag, size = 0x8, scoped, tag = 'scoped memory for tpu_custom_call.1']
    #allocation7 [shape = 'u8[8192]{0}', space=vmem, size = 0x2000, scoped, tag = 'input window, operand 1']
    #allocation8 [shape = 's32[2]{0}', space=sflag, size = 0x8, scoped, tag = 'scoped memory for tpu_custom_call.1']
    #allocation9 [shape = 'u8[16384]{0}', space=vmem, size = 0x4000, scoped, tag = 'input window, operand 2, single buffered']
    #allocation10 [shape = 'u8[1024]{0}', space=vmem, size = 0x400, scoped, tag = 'output window, operand 0, single buffered']
    %8 = vsyncpa [#allocation5], 0
    %9 = vsyncpa [#allocation8], 0
    %s10 = scalar_lea.sflag [#allocation8], 1
    %11 = vsyncpa %s10, 0
    %12 = vsyncpa [#allocation6], 0
    loop: start=0, step=1, limit=4
    $region2: #{tpu_custom_call.1} parent=1 // loop_pre_header
      _
    $region3: #{tpu_custom_call.1} parent=1 // loop_header
      %s14 = sphi 0, %s18
      %p15 = scmp.ge.s32.totalorder %s14, 4
      %s21 = sphi 0, %s33
      %s22 = sphi 0, %s29
      %s23 = sphi 0, %s21
      %s24 = sphi 0, %s22
      %s25 = sphi 0, %s23
      %s26 = sphi 0, %s24
      %s36 = sphi 0, %s38
      %s39 = sphi 0, %s36
      %s40 = sphi 0, %s39
      %s56 = sphi 0, %s40
      %s64 = sphi 0, %s66
      %s67 = sphi 0, %s64
      %s68 = sphi 0, %s67
      %s84 = sphi 0, %s68
      %s88 = sphi 0, %s88
      %s90 = sphi 0, %s88
      %s91 = sphi 0, %s90
      %s105 = sphi 0, %s91
      %s111 = sphi 0, %s113
      %s114 = sphi 0, %s111
      %s115 = sphi 0, %s114
      %s131 = sphi 0, %s115
    $region4: #{tpu_custom_call.1} parent=1 // loop_header_branch
      %17 = sbr.rel (%p15) target = $region8
    $region5: #{tpu_custom_call.1} parent=1 // loop_body
      %s19 = ssub.s32 %s14, 1
      %s20 = ssub.s32 %s14, 2
      %s27 = sadd.s32 1, %s22
      %p28 = scmp.ge.s32.totalorder %s27, 2
      %s29 = scalar_select %p28, 0, %s27
      %s30 = sadd.s32 1, %s21
      %s31 = scalar_select %p28, %s30, %s21
      %p32 = scmp.ge.s32.totalorder %s31, 1
      %s33 = scalar_select %p32, 0, %s31
      %s34 = ssub.s32 %s21, %s33
      %p35 = scmp.eq.s32.totalorder %s34, 0
      %s37 = sadd.s32 %s36, 1
      %s38 = scalar_select %p35, %s36, %s37
      %p41 = pneg %p35
      %p42 = scmp.eq.s32.totalorder %s14, 1
      %p43 = por %p41, %p42
      %p44 = scmp.ne.s32.totalorder %s36, %s39
      %p45 = scmp.eq.s32.totalorder %s14, 0
      %p46 = por %p44, %p45
      %p47 = scmp.ne.s32.totalorder %s36, %s39
      %p48 = scmp.eq.s32.totalorder %s19, 1
      %p49 = por %p47, %p48
      %p50 = scmp.ne.s32.totalorder %s39, %s40
      %p51 = scmp.eq.s32.totalorder %s19, 0
      %p52 = por %p50, %p51
      %p53 = scmp.ne.s32.totalorder %s39, %s40
      %p54 = scmp.eq.s32.totalorder %s20, 1
      %p55 = por %p53, %p54
      %p57 = scmp.ne.s32.totalorder %s40, %s56
      %p58 = scmp.eq.s32.totalorder %s20, 0
      %p59 = por %p57, %p58
      %s60 = ssub.s32 %s22, %s29
      %s61 = ssub.s32 %s21, %s33
      %s62 = sor.u32 %s60, %s61
      %p63 = scmp.eq.s32.totalorder %s62, 0
      %s65 = sadd.s32 %s64, 1
      %s66 = scalar_select %p63, %s64, %s65
      %p69 = pneg %p63
      %p70 = scmp.eq.s32.totalorder %s14, 1
      %p71 = por %p69, %p70
      %p72 = scmp.ne.s32.totalorder %s64, %s67
      %p73 = scmp.eq.s32.totalorder %s14, 0
      %p74 = por %p72, %p73
      %p75 = scmp.ne.s32.totalorder %s64, %s67
      %p76 = scmp.eq.s32.totalorder %s19, 1
      %p77 = por %p75, %p76
      %p78 = scmp.ne.s32.totalorder %s67, %s68
      %p79 = scmp.eq.s32.totalorder %s19, 0
      %p80 = por %p78, %p79
      %p81 = scmp.ne.s32.totalorder %s67, %s68
      %p82 = scmp.eq.s32.totalorder %s20, 1
      %p83 = por %p81, %p82
      %p85 = scmp.ne.s32.totalorder %s68, %s84
      %p86 = scmp.eq.s32.totalorder %s20, 0
      %p87 = por %p85, %p86
      %s89 = sadd.s32 %s88, 1
      %p92 = scmp.eq.s32.totalorder %s14, 1
      %p93 = scmp.ne.s32.totalorder %s88, %s90
      %p94 = scmp.eq.s32.totalorder %s14, 0
      %p95 = por %p93, %p94
      %p96 = scmp.ne.s32.totalorder %s88, %s90
      %p97 = scmp.eq.s32.totalorder %s19, 1
      %p98 = por %p96, %p97
      %p99 = scmp.ne.s32.totalorder %s90, %s91
      %p100 = scmp.eq.s32.totalorder %s19, 0
      %p101 = por %p99, %p100
      %p102 = scmp.ne.s32.totalorder %s90, %s91
      %p103 = scmp.eq.s32.totalorder %s20, 1
      %p104 = por %p102, %p103
      %p106 = scmp.ne.s32.totalorder %s91, %s105
      %p107 = scmp.eq.s32.totalorder %s20, 0
      %p108 = por %p106, %p107
      %s109 = ssub.s32 %s21, %s33
      %p110 = scmp.eq.s32.totalorder %s109, 0
      %s112 = sadd.s32 %s111, 1
      %s113 = scalar_select %p110, %s111, %s112
      %p116 = pneg %p110
      %p117 = scmp.eq.s32.totalorder %s14, 1
      %p118 = por %p116, %p117
      %p119 = scmp.ne.s32.totalorder %s111, %s114
      %p120 = scmp.eq.s32.totalorder %s14, 0
      %p121 = por %p119, %p120
      %p122 = scmp.ne.s32.totalorder %s111, %s114
      %p123 = scmp.eq.s32.totalorder %s19, 1
      %p124 = por %p122, %p123
      %p125 = scmp.ne.s32.totalorder %s114, %s115
      %p126 = scmp.eq.s32.totalorder %s19, 0
      %p127 = por %p125, %p126
      %p128 = scmp.ne.s32.totalorder %s114, %s115
      %p129 = scmp.eq.s32.totalorder %s20, 1
      %p130 = por %p128, %p129
      %p132 = scmp.ne.s32.totalorder %s115, %s131
      %p133 = scmp.eq.s32.totalorder %s20, 0
      %p134 = por %p132, %p133
      %p135 = scmp.le.s32.totalorder 1, %s14
      %p136 = scmp.lt.s32.totalorder %s14, 3
      %p137 = pnand %p135, %p136
      %p138 = pneg %p137
      // Predicated region
      $region9: #{tpu_custom_call.1} parent=5 // pred_check
        _
      $region10: #{tpu_custom_call.1} parent=5 // pred_check_branch
        %140 = sbr.rel (%p137) target = $region12
      $region11: #{tpu_custom_call.1} parent=5 // pred_region
        %s141 = ssub.s32 %s14, 1
        // Predicated region
        $region13: #{tpu_custom_call.1} parent=11 // pred_check
          %p142 = pneg %p52
        $region14: #{tpu_custom_call.1} parent=11 // pred_check_branch
          %144 = sbr.rel (%p142) target = $region16
        $region15: #{tpu_custom_call.1} parent=11 // pred_region
          %s146 = ssub.s32 32, 32
          %147 = vsyncadd [#allocation5], %s146
          %s148 = smul.addr %s23, 32
          %s149 = scalar_lea.hbm %s0, %s148
          %s151 = sshll.u32 [#allocation4], 4
          %s152 = int_to_ptr.vmem [resolvable:$true] %s151
          %154 = dma.hbm_to_vmem [thread:$0]  %s149, 32, %s152, [#allocation5]
        $region16: #{tpu_custom_call.1} parent=11 // pred_fallthru
          _
        // Predicated region
        $region17: #{tpu_custom_call.1} parent=11 // pred_check
          %p155 = pneg %p101
        $region18: #{tpu_custom_call.1} parent=11 // pred_check_branch
          %157 = sbr.rel (%p155) target = $region20
        $region19: #{tpu_custom_call.1} parent=11 // pred_region
          %s159 = ssub.s32 512, 512
          %160 = vsyncadd [#allocation8], %s159
          %s161 = sshll.u32 [#allocation9], 4
          %s162 = int_to_ptr.vmem [resolvable:$true] %s161
          %167 = dma.hbm_to_vmem [thread:$0]  %s2, 512, %s162, [#allocation8], 128, 128, 8
        $region20: #{tpu_custom_call.1} parent=11 // pred_fallthru
          _
      $region12: #{tpu_custom_call.1} parent=5 // pred_fallthru
        _
      %p168 = scmp.lt.s32.totalorder %s14, 2
      // Predicated region
      $region21: #{tpu_custom_call.1} parent=5 // pred_check
        %p169 = pneg %p168
      $region22: #{tpu_custom_call.1} parent=5 // pred_check_branch
        %171 = sbr.rel (%p169) target = $region24
      $region23: #{tpu_custom_call.1} parent=5 // pred_region
        // Predicated region
        $region25: #{tpu_custom_call.1} parent=23 // pred_check
          %p172 = pneg %p74
        $region26: #{tpu_custom_call.1} parent=23 // pred_check_branch
          %174 = sbr.rel (%p172) target = $region28
        $region27: #{tpu_custom_call.1} parent=23 // pred_region
          %s175 = sand.u32 %s14, 1
          %s176 = scalar_lea.sflag [#allocation8], %s175
          %s177 = sand.u32 %s64, 1
          %s178 = smul.addr %s177, 8
          %s179 = scalar_lea.vmem [#allocation7], %s178
          %s180 = smul.u32 4, %s22
          %s182 = ssub.s32 128, 128
          %183 = vsyncadd %s176, %s182
          %s184 = sadd.s32 %s21, %s180
          %s185 = smul.addr %s184, 32
          %s186 = scalar_lea.hbm %s1, %s185
          %s187 = sshll.u32 %s179, 4
          %s188 = int_to_ptr.vmem [resolvable:$true] %s187
          %193 = dma.hbm_to_vmem [thread:$0]  %s186, 128, %s188, %s176, 32, 32, 2
        $region28: #{tpu_custom_call.1} parent=23 // pred_fallthru
          _
      $region24: #{tpu_custom_call.1} parent=5 // pred_fallthru
        _
      %p194 = scmp.le.s32.totalorder 1, %s14
      %p195 = scmp.lt.s32.totalorder %s14, 3
      %p196 = pnand %p194, %p195
      %p197 = pneg %p196
      // Predicated region
      $region29: #{tpu_custom_call.1} parent=5 // pred_check
        _
      $region30: #{tpu_custom_call.1} parent=5 // pred_check_branch
        %199 = sbr.rel (%p196) target = $region32
      $region31: #{tpu_custom_call.1} parent=5 // pred_region
        %s200 = ssub.s32 %s14, 1
        // Predicated region
        $region33: #{tpu_custom_call.1} parent=31 // pred_check
          %p201 = pneg %p52
        $region34: #{tpu_custom_call.1} parent=31 // pred_check_branch
          %203 = sbr.rel (%p201) target = $region36
        $region35: #{tpu_custom_call.1} parent=31 // pred_region
          %204 = dma.done [#allocation5], 32
        $region36: #{tpu_custom_call.1} parent=31 // pred_fallthru
          _
        %s205 = sand.u32 %s19, 1
        %s206 = scalar_lea.sflag [#allocation8], %s205
        %s207 = sand.u32 %s67, 1
        %s208 = smul.addr %s207, 8
        %s209 = scalar_lea.vmem [#allocation7], %s208
        // Predicated region
        $region37: #{tpu_custom_call.1} parent=31 // pred_check
          %p210 = pneg %p80
        $region38: #{tpu_custom_call.1} parent=31 // pred_check_branch
          %212 = sbr.rel (%p210) target = $region40
        $region39: #{tpu_custom_call.1} parent=31 // pred_region
          %213 = dma.done %s206, 128
        $region40: #{tpu_custom_call.1} parent=31 // pred_fallthru
          _
        // Predicated region
        $region41: #{tpu_custom_call.1} parent=31 // pred_check
          %p214 = pneg %p101
        $region42: #{tpu_custom_call.1} parent=31 // pred_check_branch
          %216 = sbr.rel (%p214) target = $region44
        $region43: #{tpu_custom_call.1} parent=31 // pred_region
          %217 = dma.done [#allocation8], 512
        $region44: #{tpu_custom_call.1} parent=31 // pred_fallthru
          _
        %p218 = pneg %p52
        %p219 = pneg %p49
        %s220 = sand.u32 %s19, 1
        %s221 = scalar_lea.sflag [#allocation8], %s220
        %s222 = sand.u32 %s67, 1
        %s223 = smul.addr %s222, 8
        %s224 = scalar_lea.vmem [#allocation7], %s223
        %p225 = pneg %p80
        %p226 = pneg %p77
        %p227 = pneg %p101
        %p228 = pneg %p98
        %p229 = pneg %p127
        %p230 = pneg %p124
        %s231 = smul.u32 4, %s24
        %p232 = scmp.eq.s32.totalorder %s24, 0
        // Predicated region
        $region45: #{tpu_custom_call.1} parent=31 // pred_check
          %p233 = pneg %p232
        $region46: #{tpu_custom_call.1} parent=31 // pred_check_branch
          %235 = sbr.rel (%p233) target = $region48
        $region47: #{tpu_custom_call.1} parent=31 // pred_region
          %v236 = vld [vmem:[#allocation4] sm:$0x3]
          %v237 = vld [vmem:[#allocation9] sm:$0xff]
          %v238 = vld [vmem:[#allocation9 + $0x8] sm:$0xff]
          %v239 = vld [vmem:[#allocation9 + $0x10] sm:$0xff]
          %v240 = vld [vmem:[#allocation9 + $0x18] sm:$0xff]
          %vm241 = vcmask 261120
          %v243 = vsel %vm241, %v236, 0
          %245 = vmatprep.subr.mxu0 0.0
          %246 = vmatpush1.msra.mxu0 0.0
          %247 = vmatprep.subr.mxu0 0.0
          %248 = vmatpush1.msra.mxu0 0.0
          %249 = vmatprep.subr.mxu0 0.0
          %250 = vmatpush1.msra.mxu0 0.0
          %251 = vmatprep.subr.mxu0 0.0
          %252 = vmatpush1.msra.mxu0 0.0
          %253 = vmatprep.subr.mxu0 0.0
          %254 = vmatpush1.msra.mxu0 0.0
          %255 = vmatprep.subr.mxu0 0.0
          %256 = vmatpush1.msra.mxu0 0.0
          %257 = vmatprep.subr.mxu0 0.0
          %258 = vmatpush1.msra.mxu0 0.0
          %259 = vmatprep.subr.mxu0 0.0
          %260 = vmatpush1.msra.mxu0 0.0
          %261 = vmatprep.subr.mxu0 0.0
          %262 = vmatpush1.msra.mxu0 0.0
          %263 = vmatprep.subr.mxu0 0.0
          %264 = vmatpush1.msra.mxu0 0.0
          %265 = vmatprep.subr.mxu0 0.0
          %266 = vmatpush1.msra.mxu0 0.0
          %267 = vmatprep.subr.mxu0 0.0
          %268 = vmatpush1.msra.mxu0 0.0
          %269 = vmatprep.subr.mxu0 0.0
          %270 = vmatpush1.msra.mxu0 %v240
          %271 = vmatprep.subr.mxu0 0.0
          %272 = vmatpush1.msra.mxu0 %v239
          %273 = vmatprep.subr.mxu0 0.0
          %274 = vmatpush1.msra.mxu0 %v238
          %275 = vmatprep.subr.mxu0 0.0
          %276 = vmatpush1.msra.mxu0 %v237
          %277 = vmatprep.subr.mxu0 0.0
          %278 = vmatpush2.msra.mxu0 0.0
          %279 = vmatprep.subr.mxu0 0.0
          %280 = vmatpush2.msra.mxu0 0.0
          %281 = vmatprep.subr.mxu0 0.0
          %282 = vmatpush2.msra.mxu0 0.0
          %283 = vmatprep.subr.mxu0 0.0
          %284 = vmatpush2.msra.mxu0 0.0
          %285 = vmatprep.subr.mxu0 0.0
          %286 = vmatpush2.msra.mxu0 0.0
          %287 = vmatprep.subr.mxu0 0.0
          %288 = vmatpush2.msra.mxu0 0.0
          %289 = vmatprep.subr.mxu0 0.0
          %290 = vmatpush2.msra.mxu0 0.0
          %291 = vmatprep.subr.mxu0 0.0
          %292 = vmatpush2.msra.mxu0 0.0
          %293 = vmatprep.subr.mxu0 0.0
          %294 = vmatpush2.msra.mxu0 0.0
          %295 = vmatprep.subr.mxu0 0.0
          %296 = vmatpush2.msra.mxu0 0.0
          %297 = vmatprep.subr.mxu0 0.0
          %298 = vmatpush2.msra.mxu0 0.0
          %299 = vmatprep.subr.mxu0 0.0
          %300 = vmatpush2.msra.mxu0 0.0
          %301 = vmatprep.subr.mxu0 0.0
          %302 = vmatpush2.msra.mxu0 0.0
          %303 = vmatprep.subr.mxu0 0.0
          %304 = vmatpush2.msra.mxu0 0.0
          %305 = vmatprep.subr.mxu0 0.0
          %306 = vmatpush2.msra.mxu0 0.0
          %307 = vmatprep.subr.mxu0 0.0
          %308 = vmatpush2.msra.mxu0 0.0
          %309 = vmatprep.mubr.f32.mxu0 0.0
          %310 = vmatmul.mubr.f32.gmra.mxu0 %v243
          %v311 = vpop.f32.mrf.mxu0
          %v312 = vadd.f32 0.0, %v311
          %v313 = vpop.f32.mrf.mxu0
          %314 = vdwg.mxu0
          %vm315 = vcmask 254976
          %316 = vst.msk [vmem:[#allocation2] sm:$0x3] %vm315, %v312
        $region48: #{tpu_custom_call.1} parent=31 // pred_fallthru
          _
        %v317 = vld [vmem:[%s209] sm:$0x3]
        %v318 = vld [vmem:[%s209 + $0x2] sm:$0x3]
        %v319 = vld [vmem:[%s209 + $0x4] sm:$0x3]
        %v320 = vld [vmem:[%s209 + $0x6] sm:$0x3]
        %v321 = vld [vmem:[#allocation2] sm:$0x3]
        %v322 = vmul.f32 %v317, %v321
        %v323 = vmul.f32 %v318, %v321
        %v324 = vmul.f32 %v319, %v321
        %v325 = vmul.f32 %v320, %v321
        %vm326 = vcmask 254976
        %v327 = vsel %vm326, %v322, 0.0
        %328 = vadd.xlane.f32.xlu0 %v327
        %v329 = vpop.xlane.xlu0 %328
        %v330 = vsel %vm326, %v323, 0.0
        %331 = vadd.xlane.f32.xlu0 %v330
        %v332 = vpop.xlane.xlu0 %331
        %v333 = vsel %vm326, %v324, 0.0
        %334 = vadd.xlane.f32.xlu0 %v333
        %v335 = vpop.xlane.xlu0 %334
        %v336 = vsel %vm326, %v325, 0.0
        %337 = vadd.xlane.f32.xlu0 %v336
        %v338 = vpop.xlane.xlu0 %337
        %s339 = smul.u32 %s24, 4
        %v344 = vlaneseq
        %v345 = vand.u32 %v344, 127
        %v346 = vlaneseq
        %v347 = vshrl.u32 %v346, 7
        %v348 = vsub.s32 %v345, %v347
        %v349 = vrot.slane %v329, %v348
        %v350 = vlaneseq
        %v351 = vshrl.u32 %v350, 7
        %v352 = vsub.s32 %v345, %v351
        %v353 = vrot.slane %v332, %v352
        %v354 = vlaneseq
        %v355 = vshrl.u32 %v354, 7
        %v356 = vsub.s32 %v345, %v355
        %v357 = vrot.slane %v335, %v356
        %v358 = vlaneseq
        %v359 = vshrl.u32 %v358, 7
        %v360 = vsub.s32 %v345, %v359
        %v361 = vrot.slane %v338, %v360
        %vm362 = vcmask 1041409
        %v363 = vsel %vm362, %v353, %v349
        %vm364 = vcmask 1042434
        %v365 = vsel %vm364, %v357, %v363
        %vm366 = vcmask 1043459
        %v367 = vsel %vm366, %v361, %v365
        %s369 = scalar_lea.vmem [#allocation3], %s339
        %vm370 = vcmask 11264
        %371 = vst.msk [vmem:[%s369] sm:$0xf] %vm370, %v367
        %p372 = scmp.eq.s32.totalorder %s24, 1
        // Predicated region
        $region49: #{tpu_custom_call.1} parent=31 // pred_check
          %p373 = pneg %p372
        $region50: #{tpu_custom_call.1} parent=31 // pred_check_branch
          %375 = sbr.rel (%p373) target = $region52
        $region51: #{tpu_custom_call.1} parent=31 // pred_region
          %v376 = vld [vmem:[#allocation3] sm:$0xff]
          %377 = vxpose.xlu0.b32.start [1/16] %v376, 128
          %378 = vxpose.xlu0.b32.cont [2/16] 0.0, 128
          %379 = vxpose.xlu0.b32.cont [3/16] 0.0, 128
          %380 = vxpose.xlu0.b32.cont [4/16] 0.0, 128
          %381 = vxpose.xlu0.b32.cont [5/16] 0.0, 128
          %382 = vxpose.xlu0.b32.cont [6/16] 0.0, 128
          %383 = vxpose.xlu0.b32.cont [7/16] 0.0, 128
          %384 = vxpose.xlu0.b32.cont [8/16] 0.0, 128
          %385 = vxpose.xlu0.b32.cont [9/16] 0.0, 128
          %386 = vxpose.xlu0.b32.cont [10/16] 0.0, 128
          %387 = vxpose.xlu0.b32.cont [11/16] 0.0, 128
          %388 = vxpose.xlu0.b32.cont [12/16] 0.0, 128
          %389 = vxpose.xlu0.b32.cont [13/16] 0.0, 128
          %390 = vxpose.xlu0.b32.cont [14/16] 0.0, 128
          %391 = vxpose.xlu0.b32.cont [15/16] 0.0, 128
          %392 = vxpose.xlu0.b32.end [16/16] 0.0, 128
          %v393 = vpop.trf.xlu0
          %v394 = vpop.trf.xlu0
          %v395 = vpop.trf.xlu0
          %v396 = vpop.trf.xlu0
          %v397 = vpop.trf.xlu0
          %v398 = vpop.trf.xlu0
          %v399 = vpop.trf.xlu0
          %v400 = vpop.trf.xlu0
          %v401 = vpop.trf.xlu0
          %v402 = vpop.trf.xlu0
          %v403 = vpop.trf.xlu0
          %v404 = vpop.trf.xlu0
          %v405 = vpop.trf.xlu0
          %v406 = vpop.trf.xlu0
          %v407 = vpop.trf.xlu0
          %v408 = vpop.trf.xlu0
          %vm409 = vcmask 58368
          %v410 = vsel %vm409, %v393, -inf
          %411 = vmax.xlane.f32.xlu0 %v410
          %v412 = vpop.xlane.xlu0 %411
          %v413 = vsub.f32 %v393, %v412
          %v414 = vmul.f32 %v413, 1.442695
          %v415 = vpow.pop %v414
          %v416 = vsel %vm409, %v415, 0.0
          %417 = vadd.xlane.f32.xlu0 %v416
          %v418 = vpop.xlane.xlu0 %417
          %v419 = vrcp.pop %v418
          %v420 = vmul.f32 %v415, %v419
          %421 = vst.msk [vmem:[#allocation10] sm:$0x3] %vm409, %v420
        $region52: #{tpu_custom_call.1} parent=31 // pred_fallthru
          _
        // Predicated region
        $region53: #{tpu_custom_call.1} parent=31 // pred_check
          %p422 = pneg %p124
        $region54: #{tpu_custom_call.1} parent=31 // pred_check_branch
          %424 = sbr.rel (%p422) target = $region56
        $region55: #{tpu_custom_call.1} parent=31 // pred_region
          %s426 = ssub.s32 32, 32
          %427 = vsyncadd [#allocation6], %s426
          %s428 = smul.addr %s23, 32
          %s429 = scalar_lea.hbm %s3, %s428
          %s431 = sshll.u32 [#allocation10], 4
          %s432 = int_to_ptr.vmem [resolvable:$true] %s431
          %434 = dma.vmem_to_hbm [thread:$0]  %s432, 32, %s429, [#allocation6]
        $region56: #{tpu_custom_call.1} parent=31 // pred_fallthru
          _
        // Predicated region
        $region57: #{tpu_custom_call.1} parent=31 // pred_check
          %p435 = pneg %p124
        $region58: #{tpu_custom_call.1} parent=31 // pred_check_branch
          %437 = sbr.rel (%p435) target = $region60
        $region59: #{tpu_custom_call.1} parent=31 // pred_region
          %438 = dma.done [#allocation6], 32
        $region60: #{tpu_custom_call.1} parent=31 // pred_fallthru
          _
      $region32: #{tpu_custom_call.1} parent=5 // pred_fallthru
        _
      %p439 = scmp.le.s32.totalorder 2, %s14
      // Predicated region
      $region61: #{tpu_custom_call.1} parent=5 // pred_check
        %p440 = pneg %p439
      $region62: #{tpu_custom_call.1} parent=5 // pred_check_branch
        %442 = sbr.rel (%p440) target = $region64
      $region63: #{tpu_custom_call.1} parent=5 // pred_region
        %s443 = ssub.s32 %s14, 2
      $region64: #{tpu_custom_call.1} parent=5 // pred_fallthru
        _
    $region6: #{tpu_custom_call.1} parent=1 // loop_footer
      %s18 = sadd.s32 1, %s14
    $region7: #{tpu_custom_call.1} parent=1 // loop_footer_branch
      %13 = sbr.rel target = $region3
    $region8: #{tpu_custom_call.1} parent=1 // loop_exit
      _
    %444 = vsyncpa [#allocation5], 1
    %s445 = scalar_lea.sflag [#allocation5], 1
    %446 = vsyncpa %s445, 1
    %447 = vsyncpa [#allocation8], 1
    %s448 = scalar_lea.sflag [#allocation8], 1
    %449 = vsyncpa %s448, 1
    %450 = vsyncpa [#allocation6], 1
    %s451 = scalar_lea.sflag [#allocation6], 1
    %452 = vsyncpa %s451, 1

</llo_original>
